<compile_context>
chip_gen: v7x
topology: tpu7x:2x2x1
jax: 0.10.0
libtpu: 0.0.40
codegen_flags: <defaults>
</compile_context>

<pallas_src>
import functools

import jax
import jax.numpy as jnp
from jax.experimental import pallas as pl
from jax.experimental.pallas import tpu as pltpu


def _round_up(x, m):
    return (x + m - 1) // m * m


def _triplet_loss_kernel(iv_ref, ov_ref, nv_ref, out_ref, acc_ref, *, inv_c):
    step = pl.program_id(1)

    @pl.when(step == 0)
    def _init():
        acc_ref[...] = jnp.zeros_like(acc_ref)

    f32 = jnp.float32
    iv = iv_ref[...].astype(f32)                        # (TB, D)

    # Linearity of the loss in ov / nv (exact, just a different fp sum order):
    #   oloss_b = (1/C) * <sum_c ov_{b,c}, iv_b>
    #   nloss_b = -(1/C) * <sum_{c,n} nv_raw_{b,c,n}, iv_b>   (torch negates nv)
    # With the (C, TB, D)/(K, TB, D) layout the pre-sums are VPU adds over
    # dense (TB, D) vreg slabs; only two lane reductions remain per sample.
    o_sum = jnp.sum(ov_ref[...].astype(f32), axis=0)    # (TB, D)
    n_sum = jnp.sum(nv_ref[...].astype(f32), axis=0)    # (TB, D)

    oloss = jnp.sum(o_sum * iv, axis=-1, keepdims=True) * inv_c     # (TB, 1)
    nloss = -jnp.sum(n_sum * iv, axis=-1, keepdims=True) * inv_c    # (TB, 1)

    # Per-sample partials accumulate in VMEM; reduce only at finalize.
    acc_ref[...] += oloss - 0.5 * nloss * nloss

    @pl.when(step == pl.num_programs(1) - 1)
    def _finalize():
        out_ref[...] = jnp.sum(acc_ref[...], axis=0, keepdims=True).reshape(1, 1, 1)


def laplacian_eigenmap_triplet_loss(w_i, w_o, iwords, owords, nwords, n_neg,
                                    *, tb=None, n_split=2, vmem_limit_bytes=None):
    """Forward pass of LaplacianEigenMapTripletLoss.

    w_i, w_o : (V, D) embedding tables (model.forward_i / model.forward_o weights)
    iwords   : (B,)          int32
    owords   : (B, C)        int32
    nwords   : (B, C*n_neg)  int32
    """
    B = iwords.shape[0]
    C = owords.shape[1]
    D = w_i.shape[1]
    K = C * n_neg
    assert nwords.shape == (B, K)

    # Embedding gathers (glue).  Table dtype is preserved (bf16 tables stream
    # as bf16; upcast to f32 happens inside the kernel).
    # TODO(synk): fuse these gathers into the kernel (scalar-prefetch indices +
    # manual DMA row-gather from w_o in pl.ANY memory space) so the gathered
    # intermediates never round-trip HBM.
    iv = jnp.take(w_i, iwords, axis=0)                                    # (B, D)
    ov = jnp.take(w_o, owords.T.reshape(-1), axis=0).reshape(C, B, D)     # (C, B, D)
    nv = jnp.take(w_o, nwords.T.reshape(-1), axis=0).reshape(K, B, D)     # (K, B, D)

    itemsize = jnp.dtype(iv.dtype).itemsize
    row_bytes = (1 + C + K) * D * itemsize        # bytes streamed per sample

    if tb is None:
        # Biggest batch tile whose double-buffered inputs stay well inside the
        # default scoped VMEM on every generation (v5e 16 MiB .. v7x 32 MiB).
        budget = 12 << 20
        tb = max(8, min(512, (budget // row_bytes) // 8 * 8))
        tb = min(tb, _round_up((B + n_split - 1) // n_split, 8))

    b_pad = _round_up(B, n_split * tb)
    if b_pad != B:
        # Zero rows contribute exactly 0 to the accumulated sum.
        iv = jnp.pad(iv, ((0, b_pad - B), (0, 0)))
        ov = jnp.pad(ov, ((0, 0), (0, b_pad - B), (0, 0)))
        nv = jnp.pad(nv, ((0, 0), (0, b_pad - B), (0, 0)))

    n_steps = b_pad // (n_split * tb)

    tile_bytes = row_bytes * tb
    if vmem_limit_bytes is None:
        # double-buffered inputs + scratch/output + headroom
        vmem_limit_bytes = max(32 << 20, 2 * tile_bytes + (8 << 20))

    kernel = functools.partial(_triplet_loss_kernel, inv_c=1.0 / C)

    partials = pl.pallas_call(
        kernel,
        out_shape=jax.ShapeDtypeStruct((n_split, 1, 1), jnp.float32),
        grid=(n_split, n_steps),
        in_specs=[
            pl.BlockSpec((tb, D), lambda s, b: (s * n_steps + b, 0)),
            pl.BlockSpec((C, tb, D), lambda s, b: (0, s * n_steps + b, 0)),
            pl.BlockSpec((K, tb, D), lambda s, b: (0, s * n_steps + b, 0)),
        ],
        out_specs=pl.BlockSpec((1, 1, 1), lambda s, b: (s, 0, 0)),
        scratch_shapes=[pltpu.VMEM((tb, 1), jnp.float32)],
        compiler_params=pltpu.CompilerParams(
            dimension_semantics=("parallel", "arbitrary"),
            vmem_limit_bytes=int(vmem_limit_bytes),
        ),
    )(iv, ov, nv)

    return -jnp.sum(partials) / jnp.float32(B)


if __name__ == "__main__":
    key = jax.random.PRNGKey(0)
    V, D = 64, 32           # vocab size, embedding dim
    B, C, n_neg = 16, 5, 3  # batch, context words per sample, negatives per context

    k1, k2, k3, k4, k5 = jax.random.split(key, 5)
    # Deterministic synthetic "model" parameters (forward_i / forward_o tables).
    w_i = jax.random.normal(k1, (V, D), jnp.float32) * 0.1
    w_o = jax.random.normal(k2, (V, D), jnp.float32) * 0.1

    iwords = jax.random.randint(k3, (B,), 0, V, dtype=jnp.int32)
    owords = jax.random.randint(k4, (B, C), 0, V, dtype=jnp.int32)
    nwords = jax.random.randint(k5, (B, C * n_neg), 0, V, dtype=jnp.int32)

    loss = laplacian_eigenmap_triplet_loss(w_i, w_o, iwords, owords, nwords, n_neg)
    loss = jax.block_until_ready(loss)

    # Pure-JAX reference (mirrors the PyTorch forward exactly).
    iv_ref = w_i[iwords]                              # (B, D)
    ov_ref = w_o[owords]                              # (B, C, D)
    nv_ref = -w_o[nwords]                             # (B, C*n_neg, D)
    oloss_ref = jnp.einsum("bcd,bd->bc", ov_ref, iv_ref).mean(axis=1)
    nloss_ref = (jnp.einsum("bkd,bd->bk", nv_ref, iv_ref)
                 .reshape(B, C, n_neg).sum(axis=2).mean(axis=1))
    ref = -(oloss_ref - 0.5 * nloss_ref ** 2).mean()

    assert jnp.allclose(loss, ref, rtol=1e-4, atol=1e-5), (loss, ref)
    print("KERNEL_OK")
</pallas_src>

<mosaic_0001>
module attributes {stable_mosaic.version = 11 : i64} {
  func.func @_triplet_loss_kernel(%arg0: i32, %arg1: i32, %arg2: memref<8x32xf32, #tpu.memory_space<vmem>>, %arg3: memref<5x8x32xf32, #tpu.memory_space<vmem>>, %arg4: memref<15x8x32xf32, #tpu.memory_space<vmem>>, %arg5: memref<1x1x1xf32, #tpu.memory_space<vmem>>, %arg6: memref<8x1xf32, #tpu.memory_space<vmem>>) attributes {dimension_semantics = [#tpu.dimension_semantics<parallel>, #tpu.dimension_semantics<arbitrary>], iteration_bounds = array<i64: 2, 1>, scalar_prefetch = 0 : i64, scratch_operands = 1 : i64, tpu.core_type = #tpu.core_type<tc>, window_params = [{transform_indices = @transform_0, window_bounds = array<i64: 8, 32>}, {transform_indices = @transform_1, window_bounds = array<i64: 5, 8, 32>}, {transform_indices = @transform_2, window_bounds = array<i64: 15, 8, 32>}, {transform_indices = @transform_3, window_bounds = array<i64: 1, 1, 1>}]} {
    %c0_i32 = arith.constant 0 : i32
    %0 = arith.cmpi eq, %arg1, %c0_i32 : i32
    %1 = arith.extui %0 : i1 to i32
    %c0_i32_0 = arith.constant 0 : i32
    %2 = arith.cmpi ne, %1, %c0_i32_0 : i32
    scf.if %2 {
      %cst_21 = arith.constant 0.000000e+00 : f32
      %30 = vector.broadcast %cst_21 : f32 to vector<8x1xf32>
      %c0_22 = arith.constant 0 : index
      %c0_23 = arith.constant 0 : index
      %31 = vector.load %arg6[%c0_22, %c0_23] : memref<8x1xf32, #tpu.memory_space<vmem>>, vector<8x1xf32>
      tpu.vector_store %arg6[%c0_22, %c0_23], %30 {strides = array<i32>} : memref<8x1xf32, #tpu.memory_space<vmem>>, vector<8x1xf32>,
    } else {
    }
    %c0 = arith.constant 0 : index
    %c0_1 = arith.constant 0 : index
    %3 = vector.load %arg2[%c0, %c0_1] : memref<8x32xf32, #tpu.memory_space<vmem>>, vector<8x32xf32>
    %c0_2 = arith.constant 0 : index
    %c0_3 = arith.constant 0 : index
    %c0_4 = arith.constant 0 : index
    %4 = vector.load %arg3[%c0_2, %c0_3, %c0_4] : memref<5x8x32xf32, #tpu.memory_space<vmem>>, vector<5x8x32xf32>
    %cst = arith.constant dense<0.000000e+00> : vector<8x32xf32>
    %5 = vector.multi_reduction <add>, %4, %cst [0] : vector<5x8x32xf32> to vector<8x32xf32>
    %c0_5 = arith.constant 0 : index
    %c0_6 = arith.constant 0 : index
    %c0_7 = arith.constant 0 : index
    %6 = vector.load %arg4[%c0_5, %c0_6, %c0_7] : memref<15x8x32xf32, #tpu.memory_space<vmem>>, vector<15x8x32xf32>
    %cst_8 = arith.constant dense<0.000000e+00> : vector<8x32xf32>
    %7 = vector.multi_reduction <add>, %6, %cst_8 [0] : vector<15x8x32xf32> to vector<8x32xf32>
    %8 = arith.mulf %5, %3 : vector<8x32xf32>
    %cst_9 = arith.constant dense<0.000000e+00> : vector<8xf32>
    %9 = vector.multi_reduction <add>, %8, %cst_9 [1] : vector<8x32xf32> to vector<8xf32>
    %10 = vector.shape_cast %9 : vector<8xf32> to vector<8x1xf32>
    %cst_10 = arith.constant 2.000000e-01 : f32
    %11 = vector.broadcast %cst_10 : f32 to vector<8x1xf32>
    %12 = arith.mulf %10, %11 : vector<8x1xf32>
    %13 = arith.mulf %7, %3 : vector<8x32xf32>
    %cst_11 = arith.constant dense<0.000000e+00> : vector<8xf32>
    %14 = vector.multi_reduction <add>, %13, %cst_11 [1] : vector<8x32xf32> to vector<8xf32>
    %15 = vector.shape_cast %14 : vector<8xf32> to vector<8x1xf32>
    %cst_12 = arith.constant 0.000000e+00 : f32
    %16 = vector.broadcast %cst_12 : f32 to vector<8x1xf32>
    %17 = arith.subf %16, %15 : vector<8x1xf32>
    %cst_13 = arith.constant 2.000000e-01 : f32
    %18 = vector.broadcast %cst_13 : f32 to vector<8x1xf32>
    %19 = arith.mulf %17, %18 : vector<8x1xf32>
    %c0_14 = arith.constant 0 : index
    %c0_15 = arith.constant 0 : index
    %20 = vector.load %arg6[%c0_14, %c0_15] : memref<8x1xf32, #tpu.memory_space<vmem>>, vector<8x1xf32>
    %cst_16 = arith.constant 5.000000e-01 : f32
    %21 = vector.broadcast %cst_16 : f32 to vector<8x1xf32>
    %22 = arith.mulf %21, %19 : vector<8x1xf32>
    %23 = arith.mulf %22, %19 : vector<8x1xf32>
    %24 = arith.subf %12, %23 : vector<8x1xf32>
    %25 = arith.addf %20, %24 : vector<8x1xf32>
    %c0_17 = arith.constant 0 : index
    %c0_18 = arith.constant 0 : index
    %26 = vector.load %arg6[%c0_17, %c0_18] : memref<8x1xf32, #tpu.memory_space<vmem>>, vector<8x1xf32>
    tpu.vector_store %arg6[%c0_17, %c0_18], %25 {strides = array<i32>} : memref<8x1xf32, #tpu.memory_space<vmem>>, vector<8x1xf32>,
    %c0_i32_19 = arith.constant 0 : i32
    %27 = arith.cmpi eq, %arg1, %c0_i32_19 : i32
    %28 = arith.extui %27 : i1 to i32
    %c0_i32_20 = arith.constant 0 : i32
    %29 = arith.cmpi ne, %28, %c0_i32_20 : i32
    scf.if %29 {
      %c0_21 = arith.constant 0 : index
      %c0_22 = arith.constant 0 : index
      %30 = vector.load %arg6[%c0_21, %c0_22] : memref<8x1xf32, #tpu.memory_space<vmem>>, vector<8x1xf32>
      %cst_23 = arith.constant dense<0.000000e+00> : vector<1xf32>
      %31 = vector.multi_reduction <add>, %30, %cst_23 [0] : vector<8x1xf32> to vector<1xf32>
      %32 = vector.shape_cast %31 : vector<1xf32> to vector<1x1xf32>
      %33 = vector.shape_cast %32 : vector<1x1xf32> to vector<1x1x1xf32>
      %c0_24 = arith.constant 0 : index
      %c0_25 = arith.constant 0 : index
      %c0_26 = arith.constant 0 : index
      %34 = vector.load %arg5[%c0_24, %c0_25, %c0_26] : memref<1x1x1xf32, #tpu.memory_space<vmem>>, vector<1x1x1xf32>
      tpu.vector_store %arg5[%c0_24, %c0_25, %c0_26], %33 {strides = array<i32>} : memref<1x1x1xf32, #tpu.memory_space<vmem>>, vector<1x1x1xf32>,
    } else {
    }
    return
  }
  func.func @transform_0(%arg0: i32, %arg1: i32) -> (i32, i32) {
    %c1_i32 = arith.constant 1 : i32
    %0 = arith.muli %arg0, %c1_i32 : i32
    %1 = arith.addi %0, %arg1 : i32
    %c0_i32 = arith.constant 0 : i32
    %c0_i32_0 = arith.constant 0 : i32
    return %1, %c0_i32 : i32, i32
  }
  func.func @transform_1(%arg0: i32, %arg1: i32) -> (i32, i32, i32) {
    %c1_i32 = arith.constant 1 : i32
    %0 = arith.muli %arg0, %c1_i32 : i32
    %1 = arith.addi %0, %arg1 : i32
    %c0_i32 = arith.constant 0 : i32
    %c0_i32_0 = arith.constant 0 : i32
    %c0_i32_1 = arith.constant 0 : i32
    return %c0_i32, %1, %c0_i32_0 : i32, i32, i32
  }
  func.func @transform_2(%arg0: i32, %arg1: i32) -> (i32, i32, i32) {
    %c1_i32 = arith.constant 1 : i32
    %0 = arith.muli %arg0, %c1_i32 : i32
    %1 = arith.addi %0, %arg1 : i32
    %c0_i32 = arith.constant 0 : i32
    %c0_i32_0 = arith.constant 0 : i32
    %c0_i32_1 = arith.constant 0 : i32
    return %c0_i32, %1, %c0_i32_0 : i32, i32, i32
  }
  func.func @transform_3(%arg0: i32, %arg1: i32) -> (i32, i32, i32) {
    %c0_i32 = arith.constant 0 : i32
    %c0_i32_0 = arith.constant 0 : i32
    %c0_i32_1 = arith.constant 0 : i32
    return %arg0, %c0_i32, %c0_i32_0 : i32, i32, i32
  }
}

</mosaic_0001>

<llo_original>
// kernel: tpu_custom_call.1
$region0: #{tpu_custom_call.1}
  #allocation0 [shape = 'u32[]', space=smem, size = 0x4, offset = 0x4, fixed_abs, tag = 'smem constant byte address 0x4 - core index']
  #allocation1 [shape = 'u32[144,128]{1,0:T(1,128)}', space=vmem, size = 0x12000, scoped, tag = 'internal scratch']
  #allocation2 [shape = 'f32[8,1]{1,0:T(8,128)}', space=vmem, size = 0x1000, scoped, tag = 'scratch operand']
  %s0 = inlined_call_operand.hbm [shape: f32[16,32], index: 0, kind: input, shape index: {}]
  %s1 = inlined_call_operand.hbm [shape: f32[5,16,32], index: 1, kind: input, shape index: {}]
  %s2 = inlined_call_operand.hbm [shape: f32[15,16,32], index: 2, kind: input, shape index: {}]
  %s3 = inlined_call_operand.vmem [shape: f32[2,1,1], index: 3, kind: output, shape index: {}]
  %s4 = sld [smem:[#allocation0]]
  $region65: #{tpu_custom_call.1} parent=0
    _
  %s6 = ssub.s32 1, %s4
  %s7 = scalar_select 0, %s6, %s4
  $region1: #{tpu_custom_call.1} parent=0
    #allocation3 [shape = 'u8[8192]{0}', space=vmem, size = 0x2000, scoped, tag = 'input window, operand 0']
    #allocation4 [shape = 's32[2]{0}', space=sflag, size = 0x8, scoped, tag = 'scoped memory for tpu_custom_call.1']
    #allocation5 [shape = 'u8[40960]{0}', space=vmem, size = 0xa000, scoped, tag = 'input window, operand 1']
    #allocation6 [shape = 's32[2]{0}', space=sflag, size = 0x8, scoped, tag = 'scoped memory for tpu_custom_call.1']
    #allocation7 [shape = 'u8[122880]{0}', space=vmem, size = 0x1e000, scoped, tag = 'input window, operand 2']
    %8 = vsyncpa [#allocation4], 0
    %s9 = scalar_lea.sflag [#allocation4], 1
    %10 = vsyncpa %s9, 0
    %11 = vsyncpa [#allocation6], 0
    %s12 = scalar_lea.sflag [#allocation6], 1
    %13 = vsyncpa %s12, 0
    loop: start=0, step=1, limit=4
    $region2: #{tpu_custom_call.1} parent=1 // loop_pre_header
      _
    $region3: #{tpu_custom_call.1} parent=1 // loop_header
      %s15 = sphi 0, %s19
      %p16 = scmp.ge.s32.totalorder %s15, 4
      %s22 = sphi 0, %s34
      %s23 = sphi 0, %s30
      %s24 = sphi 0, %s22
      %s25 = sphi 0, %s23
      %s26 = sphi 0, %s24
      %s27 = sphi 0, %s25
      %s39 = sphi 0, %s41
      %s42 = sphi 0, %s39
      %s43 = sphi 0, %s42
      %s59 = sphi 0, %s43
      %s67 = sphi 0, %s69
      %s70 = sphi 0, %s67
      %s71 = sphi 0, %s70
      %s87 = sphi 0, %s71
      %s95 = sphi 0, %s97
      %s98 = sphi 0, %s95
      %s99 = sphi 0, %s98
      %s115 = sphi 0, %s99
      %s121 = sphi 0, %s123
      %s124 = sphi 0, %s121
      %s125 = sphi 0, %s124
      %s141 = sphi 0, %s125
    $region4: #{tpu_custom_call.1} parent=1 // loop_header_branch
      %18 = sbr.rel (%p16) target = $region8
    $region5: #{tpu_custom_call.1} parent=1 // loop_body
      %s20 = ssub.s32 %s15, 1
      %s21 = ssub.s32 %s15, 2
      %s28 = sadd.s32 1, %s23
      %p29 = scmp.ge.s32.totalorder %s28, 1
      %s30 = scalar_select %p29, 0, %s28
      %s31 = sadd.s32 1, %s22
      %s32 = scalar_select %p29, %s31, %s22
      %p33 = scmp.ge.s32.totalorder %s32, 2
      %s34 = scalar_select %p33, 0, %s32
      %s35 = sadd.s32 %s22, %s23
      %s36 = sadd.s32 %s34, %s30
      %s37 = ssub.s32 %s35, %s36
      %p38 = scmp.eq.s32.totalorder %s37, 0
      %s40 = sadd.s32 %s39, 1
      %s41 = scalar_select %p38, %s39, %s40
      %p44 = pneg %p38
      %p45 = scmp.eq.s32.totalorder %s15, 1
      %p46 = por %p44, %p45
      %p47 = scmp.ne.s32.totalorder %s39, %s42
      %p48 = scmp.eq.s32.totalorder %s15, 0
      %p49 = por %p47, %p48
      %p50 = scmp.ne.s32.totalorder %s39, %s42
      %p51 = scmp.eq.s32.totalorder %s20, 1
      %p52 = por %p50, %p51
      %p53 = scmp.ne.s32.totalorder %s42, %s43
      %p54 = scmp.eq.s32.totalorder %s20, 0
      %p55 = por %p53, %p54
      %p56 = scmp.ne.s32.totalorder %s42, %s43
      %p57 = scmp.eq.s32.totalorder %s21, 1
      %p58 = por %p56, %p57
      %p60 = scmp.ne.s32.totalorder %s43, %s59
      %p61 = scmp.eq.s32.totalorder %s21, 0
      %p62 = por %p60, %p61
      %s63 = sadd.s32 %s22, %s23
      %s64 = sadd.s32 %s34, %s30
      %s65 = ssub.s32 %s63, %s64
      %p66 = scmp.eq.s32.totalorder %s65, 0
      %s68 = sadd.s32 %s67, 1
      %s69 = scalar_select %p66, %s67, %s68
      %p72 = pneg %p66
      %p73 = scmp.eq.s32.totalorder %s15, 1
      %p74 = por %p72, %p73
      %p75 = scmp.ne.s32.totalorder %s67, %s70
      %p76 = scmp.eq.s32.totalorder %s15, 0
      %p77 = por %p75, %p76
      %p78 = scmp.ne.s32.totalorder %s67, %s70
      %p79 = scmp.eq.s32.totalorder %s20, 1
      %p80 = por %p78, %p79
      %p81 = scmp.ne.s32.totalorder %s70, %s71
      %p82 = scmp.eq.s32.totalorder %s20, 0
      %p83 = por %p81, %p82
      %p84 = scmp.ne.s32.totalorder %s70, %s71
      %p85 = scmp.eq.s32.totalorder %s21, 1
      %p86 = por %p84, %p85
      %p88 = scmp.ne.s32.totalorder %s71, %s87
      %p89 = scmp.eq.s32.totalorder %s21, 0
      %p90 = por %p88, %p89
      %s91 = sadd.s32 %s22, %s23
      %s92 = sadd.s32 %s34, %s30
      %s93 = ssub.s32 %s91, %s92
      %p94 = scmp.eq.s32.totalorder %s93, 0
      %s96 = sadd.s32 %s95, 1
      %s97 = scalar_select %p94, %s95, %s96
      %p100 = pneg %p94
      %p101 = scmp.eq.s32.totalorder %s15, 1
      %p102 = por %p100, %p101
      %p103 = scmp.ne.s32.totalorder %s95, %s98
      %p104 = scmp.eq.s32.totalorder %s15, 0
      %p105 = por %p103, %p104
      %p106 = scmp.ne.s32.totalorder %s95, %s98
      %p107 = scmp.eq.s32.totalorder %s20, 1
      %p108 = por %p106, %p107
      %p109 = scmp.ne.s32.totalorder %s98, %s99
      %p110 = scmp.eq.s32.totalorder %s20, 0
      %p111 = por %p109, %p110
      %p112 = scmp.ne.s32.totalorder %s98, %s99
      %p113 = scmp.eq.s32.totalorder %s21, 1
      %p114 = por %p112, %p113
      %p116 = scmp.ne.s32.totalorder %s99, %s115
      %p117 = scmp.eq.s32.totalorder %s21, 0
      %p118 = por %p116, %p117
      %s119 = ssub.s32 %s22, %s34
      %p120 = scmp.eq.s32.totalorder %s119, 0
      %s122 = sadd.s32 %s121, 1
      %s123 = scalar_select %p120, %s121, %s122
      %p126 = pneg %p120
      %p127 = scmp.eq.s32.totalorder %s15, 1
      %p128 = por %p126, %p127
      %p129 = scmp.ne.s32.totalorder %s121, %s124
      %p130 = scmp.eq.s32.totalorder %s15, 0
      %p131 = por %p129, %p130
      %p132 = scmp.ne.s32.totalorder %s121, %s124
      %p133 = scmp.eq.s32.totalorder %s20, 1
      %p134 = por %p132, %p133
      %p135 = scmp.ne.s32.totalorder %s124, %s125
      %p136 = scmp.eq.s32.totalorder %s20, 0
      %p137 = por %p135, %p136
      %p138 = scmp.ne.s32.totalorder %s124, %s125
      %p139 = scmp.eq.s32.totalorder %s21, 1
      %p140 = por %p138, %p139
      %p142 = scmp.ne.s32.totalorder %s125, %s141
      %p143 = scmp.eq.s32.totalorder %s21, 0
      %p144 = por %p142, %p143
      %p145 = scmp.le.s32.totalorder 1, %s15
      %p146 = scmp.lt.s32.totalorder %s15, 3
      %p147 = pnand %p145, %p146
      %p148 = pneg %p147
      // Predicated region
      $region9: #{tpu_custom_call.1} parent=5 // pred_check
        _
      $region10: #{tpu_custom_call.1} parent=5 // pred_check_branch
        %150 = sbr.rel (%p147) target = $region12
      $region11: #{tpu_custom_call.1} parent=5 // pred_region
        %s151 = ssub.s32 %s15, 1
      $region12: #{tpu_custom_call.1} parent=5 // pred_fallthru
        _
      %p152 = scmp.lt.s32.totalorder %s15, 2
      // Predicated region
      $region13: #{tpu_custom_call.1} parent=5 // pred_check
        %p153 = pneg %p152
      $region14: #{tpu_custom_call.1} parent=5 // pred_check_branch
        %155 = sbr.rel (%p153) target = $region16
      $region15: #{tpu_custom_call.1} parent=5 // pred_region
        // Predicated region
        $region17: #{tpu_custom_call.1} parent=15 // pred_check
          %p156 = pneg %p49
        $region18: #{tpu_custom_call.1} parent=15 // pred_check_branch
          %158 = sbr.rel (%p156) target = $region20
        $region19: #{tpu_custom_call.1} parent=15 // pred_region
          %s159 = sand.u32 %s39, 1
          %s160 = scalar_lea.sflag [#allocation4], %s159
          %s161 = sand.u32 %s39, 1
          %s162 = smul.addr %s161, 8
          %s163 = scalar_lea.vmem [#allocation3], %s162
          %s164 = sadd.s32 %s22, %s23
          %s166 = ssub.s32 128, 128
          %167 = vsyncadd %s160, %s166
          %s168 = smul.addr %s164, 128
          %s169 = scalar_lea.hbm %s0, %s168
          %s171 = sshll.u32 %s163, 4
          %s172 = int_to_ptr.vmem [resolvable:$true] %s171
          %174 = dma.hbm_to_vmem [thread:$0]  %s169, 128, %s172, %s160
        $region20: #{tpu_custom_call.1} parent=15 // pred_fallthru
          _
        // Predicated region
        $region21: #{tpu_custom_call.1} parent=15 // pred_check
          %p175 = pneg %p77
        $region22: #{tpu_custom_call.1} parent=15 // pred_check_branch
          %177 = sbr.rel (%p175) target = $region24
        $region23: #{tpu_custom_call.1} parent=15 // pred_region
          %s178 = sand.u32 %s15, 1
          %s179 = scalar_lea.sflag [#allocation6], %s178
          %s180 = sand.u32 %s67, 1
          %s181 = smul.addr %s180, 40
          %s182 = scalar_lea.vmem [#allocation5], %s181
          %s183 = sadd.s32 %s22, %s23
          %s185 = ssub.s32 640, 640
          %186 = vsyncadd %s179, %s185
          %s187 = smul.addr %s183, 128
          %s188 = scalar_lea.hbm %s1, %s187
          %s189 = sshll.u32 %s182, 4
          %s190 = int_to_ptr.vmem [resolvable:$true] %s189
          %195 = dma.hbm_to_vmem [thread:$0]  %s188, 640, %s190, %s179, 256, 128, 8
        $region24: #{tpu_custom_call.1} parent=15 // pred_fallthru
          _
        // Predicated region
        $region25: #{tpu_custom_call.1} parent=15 // pred_check
          %p196 = pneg %p105
        $region26: #{tpu_custom_call.1} parent=15 // pred_check_branch
          %198 = sbr.rel (%p196) target = $region28
        $region27: #{tpu_custom_call.1} parent=15 // pred_region
          %s199 = sand.u32 %s15, 1
          %s200 = scalar_lea.sflag [#allocation6], %s199
          %s201 = sand.u32 %s95, 1
          %s202 = smul.addr %s201, 120
          %s203 = scalar_lea.vmem [#allocation7], %s202
          %s204 = sadd.s32 %s22, %s23
          %s206 = ssub.s32 1920, 1920
          %207 = vsyncadd %s200, %s206
          %s208 = smul.addr %s204, 128
          %s209 = scalar_lea.hbm %s2, %s208
          %s210 = sshll.u32 %s203, 4
          %s211 = int_to_ptr.vmem [resolvable:$true] %s210
          %216 = dma.hbm_to_vmem [thread:$0]  %s209, 1920, %s211, %s200, 256, 128, 8
        $region28: #{tpu_custom_call.1} parent=15 // pred_fallthru
          _
      $region16: #{tpu_custom_call.1} parent=5 // pred_fallthru
        _
      %p217 = scmp.le.s32.totalorder 1, %s15
      %p218 = scmp.lt.s32.totalorder %s15, 3
      %p219 = pnand %p217, %p218
      %p220 = pneg %p219
      // Predicated region
      $region29: #{tpu_custom_call.1} parent=5 // pred_check
        _
      $region30: #{tpu_custom_call.1} parent=5 // pred_check_branch
        %222 = sbr.rel (%p219) target = $region32
      $region31: #{tpu_custom_call.1} parent=5 // pred_region
        %s223 = ssub.s32 %s15, 1
        %s224 = sand.u32 %s42, 1
        %s225 = scalar_lea.sflag [#allocation4], %s224
        %s226 = sand.u32 %s42, 1
        %s227 = smul.addr %s226, 8
        %s228 = scalar_lea.vmem [#allocation3], %s227
        // Predicated region
        $region33: #{tpu_custom_call.1} parent=31 // pred_check
          %p229 = pneg %p55
        $region34: #{tpu_custom_call.1} parent=31 // pred_check_branch
          %231 = sbr.rel (%p229) target = $region36
        $region35: #{tpu_custom_call.1} parent=31 // pred_region
          %232 = dma.done %s225, 128
        $region36: #{tpu_custom_call.1} parent=31 // pred_fallthru
          _
        %s233 = sand.u32 %s20, 1
        %s234 = scalar_lea.sflag [#allocation6], %s233
        %s235 = sand.u32 %s70, 1
        %s236 = smul.addr %s235, 40
        %s237 = scalar_lea.vmem [#allocation5], %s236
        // Predicated region
        $region37: #{tpu_custom_call.1} parent=31 // pred_check
          %p238 = pneg %p83
        $region38: #{tpu_custom_call.1} parent=31 // pred_check_branch
          %240 = sbr.rel (%p238) target = $region40
        $region39: #{tpu_custom_call.1} parent=31 // pred_region
          %241 = dma.done %s234, 640
        $region40: #{tpu_custom_call.1} parent=31 // pred_fallthru
          _
        %s242 = sand.u32 %s20, 1
        %s243 = scalar_lea.sflag [#allocation6], %s242
        %s244 = sand.u32 %s98, 1
        %s245 = smul.addr %s244, 120
        %s246 = scalar_lea.vmem [#allocation7], %s245
        // Predicated region
        $region41: #{tpu_custom_call.1} parent=31 // pred_check
          %p247 = pneg %p111
        $region42: #{tpu_custom_call.1} parent=31 // pred_check_branch
          %249 = sbr.rel (%p247) target = $region44
        $region43: #{tpu_custom_call.1} parent=31 // pred_region
          %250 = dma.done %s243, 1920
        $region44: #{tpu_custom_call.1} parent=31 // pred_fallthru
          _
        %s251 = sand.u32 %s42, 1
        %s252 = scalar_lea.sflag [#allocation4], %s251
        %s253 = sand.u32 %s42, 1
        %s254 = smul.addr %s253, 8
        %s255 = scalar_lea.vmem [#allocation3], %s254
        %p256 = pneg %p55
        %p257 = pneg %p52
        %s258 = sand.u32 %s20, 1
        %s259 = scalar_lea.sflag [#allocation6], %s258
        %s260 = sand.u32 %s70, 1
        %s261 = smul.addr %s260, 40
        %s262 = scalar_lea.vmem [#allocation5], %s261
        %p263 = pneg %p83
        %p264 = pneg %p80
        %s265 = sand.u32 %s20, 1
        %s266 = scalar_lea.sflag [#allocation6], %s265
        %s267 = sand.u32 %s98, 1
        %s268 = smul.addr %s267, 120
        %s269 = scalar_lea.vmem [#allocation7], %s268
        %p270 = pneg %p111
        %p271 = pneg %p108
        %p272 = pneg %p137
        %p273 = pneg %p134
        %p274 = scmp.lt.s32.totalorder %s24, 1
        %s275 = scalar_select %p274, %s24, 1
        %s276 = scalar_lea.vmem %s3, %s275
        %s277 = sadd.s32 %s24, %s25
        %s278 = sadd.s32 %s24, %s25
        %s279 = sadd.s32 %s24, %s25
        %p280 = scmp.lt.s32.totalorder %s24, 1
        %s281 = scalar_select %p280, %s24, 1
        %s282 = scalar_lea.vmem %s3, %s281
        %p283 = scmp.eq.s32.totalorder %s25, 0
        // Predicated region
        $region45: #{tpu_custom_call.1} parent=31 // pred_check
          %p284 = pneg %p283
        $region46: #{tpu_custom_call.1} parent=31 // pred_check_branch
          %286 = sbr.rel (%p284) target = $region48
        $region47: #{tpu_custom_call.1} parent=31 // pred_region
          %vm287 = vcmask 7168
          %288 = vst.msk [vmem:[#allocation2] sm:$0xff] %vm287, 0.0
        $region48: #{tpu_custom_call.1} parent=31 // pred_fallthru
          _
        %v289 = vld [vmem:[%s228] sm:$0xff]
        %v290 = vld [vmem:[%s237] sm:$0xff]
        %v291 = vld [vmem:[%s237 + $0x8] sm:$0xff]
        %v292 = vld [vmem:[%s237 + $0x10] sm:$0xff]
        %v293 = vld [vmem:[%s237 + $0x18] sm:$0xff]
        %v294 = vld [vmem:[%s237 + $0x20] sm:$0xff]
        %vm295 = vcmask 261120
        %v296 = vsel %vm295, %v290, 0.0
        %v297 = vsel %vm295, %v291, 0.0
        %v298 = vadd.f32 %v296, %v297
        %v299 = vsel %vm295, %v292, 0.0
        %v300 = vadd.f32 %v298, %v299
        %v301 = vsel %vm295, %v293, 0.0
        %v302 = vadd.f32 %v300, %v301
        %v303 = vsel %vm295, %v294, 0.0
        %v304 = vadd.f32 %v302, %v303
        %v305 = vld [vmem:[%s246] sm:$0xff]
        %v306 = vld [vmem:[%s246 + $0x8] sm:$0xff]
        %v307 = vld [vmem:[%s246 + $0x10] sm:$0xff]
        %v308 = vld [vmem:[%s246 + $0x18] sm:$0xff]
        %v309 = vld [vmem:[%s246 + $0x20] sm:$0xff]
        %v310 = vld [vmem:[%s246 + $0x28] sm:$0xff]
        %v311 = vld [vmem:[%s246 + $0x30] sm:$0xff]
        %v312 = vld [vmem:[%s246 + $0x38] sm:$0xff]
        %v313 = vld [vmem:[%s246 + $0x40] sm:$0xff]
        %v314 = vld [vmem:[%s246 + $0x48] sm:$0xff]
        %v315 = vld [vmem:[%s246 + $0x50] sm:$0xff]
        %v316 = vld [vmem:[%s246 + $0x58] sm:$0xff]
        %v317 = vld [vmem:[%s246 + $0x60] sm:$0xff]
        %v318 = vld [vmem:[%s246 + $0x68] sm:$0xff]
        %v319 = vld [vmem:[%s246 + $0x70] sm:$0xff]
        %v320 = vsel %vm295, %v305, 0.0
        %v321 = vsel %vm295, %v306, 0.0
        %v322 = vadd.f32 %v320, %v321
        %v323 = vsel %vm295, %v307, 0.0
        %v324 = vadd.f32 %v322, %v323
        %v325 = vsel %vm295, %v308, 0.0
        %v326 = vadd.f32 %v324, %v325
        %v327 = vsel %vm295, %v309, 0.0
        %v328 = vadd.f32 %v326, %v327
        %v329 = vsel %vm295, %v310, 0.0
        %v330 = vadd.f32 %v328, %v329
        %v331 = vsel %vm295, %v311, 0.0
        %v332 = vadd.f32 %v330, %v331
        %v333 = vsel %vm295, %v312, 0.0
        %v334 = vadd.f32 %v332, %v333
        %v335 = vsel %vm295, %v313, 0.0
        %v336 = vadd.f32 %v334, %v335
        %v337 = vsel %vm295, %v314, 0.0
        %v338 = vadd.f32 %v336, %v337
        %v339 = vsel %vm295, %v315, 0.0
        %v340 = vadd.f32 %v338, %v339
        %v341 = vsel %vm295, %v316, 0.0
        %v342 = vadd.f32 %v340, %v341
        %v343 = vsel %vm295, %v317, 0.0
        %v344 = vadd.f32 %v342, %v343
        %v345 = vsel %vm295, %v318, 0.0
        %v346 = vadd.f32 %v344, %v345
        %v347 = vsel %vm295, %v319, 0.0
        %v348 = vadd.f32 %v346, %v347
        %v349 = vmul.f32 %v304, %v289
        %v350 = vsel %vm295, %v349, 0.0
        %351 = vadd.xlane.f32.xlu0 %v350
        %v352 = vpop.xlane.xlu0 %351
        %v353 = vmul.f32 %v352, 0.2
        %v354 = vmul.f32 %v348, %v289
        %v355 = vsel %vm295, %v354, 0.0
        %356 = vadd.xlane.f32.xlu0 %v355
        %v357 = vpop.xlane.xlu0 %356
        %v358 = vsub.f32 0.0, %v357
        %v359 = vmul.f32 %v358, 0.2
        %v360 = vld [vmem:[#allocation2] sm:$0xff]
        %v361 = vmul.f32 %v359, 0.5
        %v362 = vmul.f32 %v361, %v359
        %v363 = vsub.f32 %v353, %v362
        %v364 = vadd.f32 %v360, %v363
        %vm365 = vcmask 7168
        %366 = vst.msk [vmem:[#allocation2] sm:$0xff] %vm365, %v364
        // Predicated region
        $region49: #{tpu_custom_call.1} parent=31 // pred_check
          %p367 = pneg %p283
        $region50: #{tpu_custom_call.1} parent=31 // pred_check_branch
          %369 = sbr.rel (%p367) target = $region52
        $region51: #{tpu_custom_call.1} parent=31 // pred_region
          %v370 = vld [vmem:[#allocation2] sm:$0xff]
          %v371 = vsel %vm365, %v370, 0.0
          %v372 = vrot.slane %v371, 4
          %v373 = vadd.f32 %v371, %v372
          %v374 = vrot.slane %v373, 2
          %v375 = vadd.f32 %v373, %v374
          %v376 = vrot.slane %v375, 1
          %v377 = vadd.f32 %v375, %v376
          %vm378 = vcmask 0
          %379 = vst.msk [vmem:[%s282] sm:$0x1] %vm378, %v377
        $region52: #{tpu_custom_call.1} parent=31 // pred_fallthru
          _
        %p380 = scmp.lt.s32.totalorder %s24, 1
        %s381 = scalar_select %p380, %s24, 1
        %s382 = scalar_lea.vmem %s3, %s381
        // Predicated region
        $region53: #{tpu_custom_call.1} parent=31 // pred_check
          %p383 = pneg %p134
        $region54: #{tpu_custom_call.1} parent=31 // pred_check_branch
          %385 = sbr.rel (%p383) target = $region56
        $region55: #{tpu_custom_call.1} parent=31 // pred_region
          _
        $region56: #{tpu_custom_call.1} parent=31 // pred_fallthru
          _
      $region32: #{tpu_custom_call.1} parent=5 // pred_fallthru
        _
      %p386 = scmp.le.s32.totalorder 2, %s15
      // Predicated region
      $region57: #{tpu_custom_call.1} parent=5 // pred_check
        %p387 = pneg %p386
      $region58: #{tpu_custom_call.1} parent=5 // pred_check_branch
        %389 = sbr.rel (%p387) target = $region60
      $region59: #{tpu_custom_call.1} parent=5 // pred_region
        %s390 = ssub.s32 %s15, 2
        // Predicated region
        $region61: #{tpu_custom_call.1} parent=59 // pred_check
          %p391 = pneg %p140
        $region62: #{tpu_custom_call.1} parent=59 // pred_check_branch
          %393 = sbr.rel (%p391) target = $region64
        $region63: #{tpu_custom_call.1} parent=59 // pred_region
          %p394 = scmp.lt.s32.totalorder %s26, 1
          %s395 = scalar_select %p394, %s26, 1
          %s396 = scalar_lea.vmem %s3, %s395
        $region64: #{tpu_custom_call.1} parent=59 // pred_fallthru
          _
      $region60: #{tpu_custom_call.1} parent=5 // pred_fallthru
        _
    $region6: #{tpu_custom_call.1} parent=1 // loop_footer
      %s19 = sadd.s32 1, %s15
    $region7: #{tpu_custom_call.1} parent=1 // loop_footer_branch
      %14 = sbr.rel target = $region3
    $region8: #{tpu_custom_call.1} parent=1 // loop_exit
      _
    %397 = vsyncpa [#allocation4], 1
    %s398 = scalar_lea.sflag [#allocation4], 1
    %399 = vsyncpa %s398, 1
    %400 = vsyncpa [#allocation6], 1
    %s401 = scalar_lea.sflag [#allocation6], 1
    %402 = vsyncpa %s401, 1

</llo_original>
